<compile_context>
chip_gen: v7x
topology: tpu7x:2x2x1
jax: 0.10.0
libtpu: 0.0.40
codegen_flags: <defaults>
</compile_context>

<pallas_src>
import functools

import jax
import jax.numpy as jnp
from jax.experimental import pallas as pl
from jax.experimental.pallas import tpu as pltpu

LN_EPS = 1e-5  # PyTorch nn.LayerNorm default


def _layernorm(x, gamma, beta):
    # fp32 statistics (bf16 only feeds the MXU).
    mu = jnp.mean(x, axis=-1, keepdims=True)
    var = jnp.mean((x - mu) ** 2, axis=-1, keepdims=True)
    return (x - mu) * jax.lax.rsqrt(var + LN_EPS) * gamma + beta


def _vmem_limit_bytes():
    # Re-derive per generation: ~3/4 of physical VMEM (64 MiB on v7x,
    # 128 MiB on v5e/v6e), capped at 100 MiB.
    phys = 128 * 1024 * 1024
    try:
        phys = int(pltpu.get_tpu_info().vmem_capacity_bytes)
    except Exception:
        pass
    return min(100 * 1024 * 1024, (phys * 3) // 4)


# ----------------------------------------------------------------------------
# Prelude kernel: x = norm_in(lin_in(x)) + pe      grid = (B,)
# Kept as a separate (tiny) call so w_in / pvec / pe never sit in the layer
# kernel's steady-state VMEM.
# ----------------------------------------------------------------------------
def encoder_prelude_kernel(x_ref,      # (1, T, D) bf16
                           w_in_ref,   # (D, D)    bf16
                           pvec_ref,   # (3, D)    f32  [b_in, g_in, be_in]
                           pe_ref,     # (T, D)    bf16
                           o_ref):     # (1, T, D) f32
    pvec = pvec_ref[...]
    y = jnp.dot(x_ref[0], w_in_ref[...], preferred_element_type=jnp.float32)
    y = y + pvec[0:1, :]
    y = _layernorm(y, pvec[1:2, :], pvec[2:3, :])
    o_ref[0] = y + pe_ref[...].astype(jnp.float32)


# ----------------------------------------------------------------------------
# Layer-stack kernel: grid = (L, B), layer outer / batch inner.
# Per-layer weight blocks have index (l, ...) -> constant across the inner
# batch axis -> DMA'd once per layer.  The (B, T, D) f32 activation lives in a
# VMEM scratch across the whole grid; the bf16 output block is resident
# (constant index) and written back to HBM once, at the end.
# ----------------------------------------------------------------------------
def encoder_layers_kernel(lens_ref,    # SMEM (B,) int32 (scalar prefetch)
                          x0_ref,      # (1, T, D)   f32   prelude output (used at l==0)
                          wqkv_ref,    # (1, D, 3D)  bf16  [Wq*s | Wk | Wv]
                          bqkv_ref,    # (1, 1, 3D)  f32   [bq*s | bk | bv]
                          wo_ref,      # (1, D, D)   bf16  output projection
                          w1_ref,      # (1, D, F)   bf16
                          b1_ref,      # (1, 1, F)   f32
                          w2_ref,      # (1, F, D)   bf16
                          vecs_ref,    # (1, 6, D)   f32   [bo, g1, be1, g2, be2, b2]
                          o_ref,       # (B, T, D)   bf16  resident output
                          xs_ref,      # VMEM (B, T, D) f32 carried activation
                          *, num_heads):
    l = pl.program_id(0)
    b = pl.program_id(1)
    H = num_heads

    @pl.when(l == 0)
    def _():
        xs_ref[b] = x0_ref[0]

    x = xs_ref[b]                                                   # (T, D) f32
    T, D = x.shape
    dh = D // H

    # Masks built in-kernel from lens (couple of VPU ops, no DMA streams).
    length = lens_ref[b]
    kbias = jnp.where(
        jax.lax.broadcasted_iota(jnp.int32, (1, T), 1) < length,
        0.0, -1e9).astype(jnp.float32)                              # (1, T) key-pad bias
    npad = (jax.lax.broadcasted_iota(jnp.int32, (T, 1), 0)
            < length).astype(jnp.float32)                           # (T, 1) non-pad mask

    vecs = vecs_ref[0]                                              # (6, D)
    bo, g1, be1 = vecs[0:1, :], vecs[1:2, :], vecs[2:3, :]
    g2, be2, b2 = vecs[3:4, :], vecs[4:5, :], vecs[5:6, :]

    xb = x.astype(jnp.bfloat16)

    # --- fused QKV projection: single lane-dense (T,D)@(D,3D) matmul ----------
    qkv = jnp.dot(xb, wqkv_ref[0], preferred_element_type=jnp.float32) + bqkv_ref[0]
    qkv = qkv.astype(jnp.bfloat16)          # cast once; q/k/v stay bf16
    q, k, v = qkv[:, 0:D], qkv[:, D:2 * D], qkv[:, 2 * D:3 * D]

    # --- multi-head self attention -------------------------------------------
    # One head at a time: peak live score tensor is (T, T), not (H, T, T);
    # per-head (T,dh)@(dh,D) output products accumulate straight into a single
    # (T, D) f32 accumulator (no (H,T,D) intermediate, no H-way stack+reduce).
    # TODO(synk): flash-style key-block online softmax for production T (v7x).
    wo = wo_ref[0]                                                  # (D, D) bf16
    attn = jnp.zeros((T, D), jnp.float32)
    for h in range(H):                      # H is small & static -> unrolled
        sl = slice(h * dh, (h + 1) * dh)
        s = jax.lax.dot_general(q[:, sl], k[:, sl],
                                (((1,), (1,)), ((), ())),
                                preferred_element_type=jnp.float32)  # (T, T)
        s = s + kbias                        # 1/sqrt(dh) folded into Wq/bq
        m = jnp.max(s, axis=-1, keepdims=True)
        p = jnp.exp(s - m)
        denom = jnp.sum(p, axis=-1, keepdims=True)
        p = (p * pl.reciprocal(denom, approx=True)).astype(jnp.bfloat16)
        ctx = jnp.dot(p, v[:, sl], preferred_element_type=jnp.float32)   # (T, dh)
        attn = attn + jnp.dot(ctx.astype(jnp.bfloat16), wo[sl, :],
                              preferred_element_type=jnp.float32)        # (T, D)
    attn = attn + bo

    x1 = _layernorm(x + attn, g1, be1) * npad                        # norm1 + non_pad

    # --- feed forward ----------------------------------------------------------
    # TODO(synk): tile the inner dim F (pl.ds chunks) for v7x at production F.
    hmid = jnp.dot(x1.astype(jnp.bfloat16), w1_ref[0],
                   preferred_element_type=jnp.float32) + b1_ref[0]
    hmid = jnp.maximum(hmid, 0.0).astype(jnp.bfloat16)               # ReLU
    ff = jnp.dot(hmid, w2_ref[0], preferred_element_type=jnp.float32) + b2

    x2 = _layernorm(x1 + ff, g2, be2) * npad                         # norm2 + non_pad

    xs_ref[b] = x2                                                   # carry to next layer

    @pl.when(l == pl.num_programs(0) - 1)
    def _():
        o_ref[b] = x2.astype(o_ref.dtype)                            # bf16 writeback


# ----------------------------------------------------------------------------
# Wrapper: layout glue, weight stacking/packing, pallas_calls.
# ----------------------------------------------------------------------------
def encoder_forward(x4d, lens, params, *, num_heads):
    B, C1, C2, T = x4d.shape
    D = C1 * C2
    H = num_heads
    dh = D // H
    layers = params["layers"]
    L = len(layers)
    F = layers[0]["w1"].shape[1]
    scale = 1.0 / float(dh) ** 0.5
    vmem_limit = _vmem_limit_bytes()

    # view + transpose (glue): (B, C1, C2, T) -> (B, T, D), bf16 for the MXU.
    x = x4d.reshape(B, D, T).transpose(0, 2, 1).astype(jnp.bfloat16)

    # ---- prelude params + call ------------------------------------------------
    w_in = params["w_in"].astype(jnp.bfloat16)                              # (D, D)
    pvec = jnp.concatenate([params["b_in"], params["g_in"], params["be_in"]],
                           axis=0).astype(jnp.float32)                      # (3, D)
    pe = params["pe"].astype(jnp.bfloat16)                                  # (T, D)

    x0 = pl.pallas_call(
        encoder_prelude_kernel,
        out_shape=jax.ShapeDtypeStruct((B, T, D), jnp.float32),
        grid=(B,),
        in_specs=[
            pl.BlockSpec((1, T, D), lambda b: (b, 0, 0)),
            pl.BlockSpec((D, D), lambda b: (0, 0)),
            pl.BlockSpec((3, D), lambda b: (0, 0)),
            pl.BlockSpec((T, D), lambda b: (0, 0)),
        ],
        out_specs=pl.BlockSpec((1, T, D), lambda b: (b, 0, 0)),
        compiler_params=pltpu.CompilerParams(
            dimension_semantics=("parallel",),
            vmem_limit_bytes=vmem_limit),
    )(x, w_in, pvec, pe)

    # ---- per-layer weight slabs, stacked with a leading layer axis ------------
    def stack(fn):
        return jnp.stack([fn(lp) for lp in layers], axis=0)

    wqkv = stack(lambda lp: jnp.concatenate(
        [lp["wq"] * scale, lp["wk"], lp["wv"]], axis=1)).astype(jnp.bfloat16)  # (L, D, 3D)
    bqkv = stack(lambda lp: jnp.concatenate(
        [lp["bq"] * scale, lp["bk"], lp["bv"]], axis=1)).astype(jnp.float32)   # (L, 1, 3D)
    wo = stack(lambda lp: lp["wo"]).astype(jnp.bfloat16)                        # (L, D, D)
    w1s = stack(lambda lp: lp["w1"]).astype(jnp.bfloat16)                       # (L, D, F)
    b1s = stack(lambda lp: lp["b1"]).astype(jnp.float32)                        # (L, 1, F)
    w2s = stack(lambda lp: lp["w2"]).astype(jnp.bfloat16)                       # (L, F, D)
    vecs = stack(lambda lp: jnp.concatenate(
        [lp["bo"], lp["g1"], lp["be1"], lp["g2"], lp["be2"], lp["b2"]],
        axis=0)).astype(jnp.float32)                                            # (L, 6, D)

    # Weight blocks: index (l, 0, ...) constant across the inner batch axis
    # -> each layer's weights are DMA'd exactly once per layer.
    per_l = lambda shape: pl.BlockSpec(
        shape, lambda l, b, lens_ref: (l,) + (0,) * (len(shape) - 1))

    grid_spec = pltpu.PrefetchScalarGridSpec(
        num_scalar_prefetch=1,                      # lens -> SMEM
        grid=(L, B),                                # layer outer, batch inner
        in_specs=[
            # prelude activation: only read at l==0; index pins to block 0 for
            # l>0 so it is not re-streamed once the layer loop is under way.
            pl.BlockSpec((1, T, D),
                         lambda l, b, lens_ref: (jnp.where(l == 0, b, 0), 0, 0)),
            per_l((1, D, 3 * D)),        # Wq|Wk|Wv (q pre-scaled)
            per_l((1, 1, 3 * D)),        # bq|bk|bv
            per_l((1, D, D)),            # Wo
            per_l((1, D, F)),            # FF W1
            per_l((1, 1, F)),            # FF b1
            per_l((1, F, D)),            # FF W2
            per_l((1, 6, D)),            # [bo, g1, be1, g2, be2, b2]
        ],
        # Resident full-array output block (constant index): written to HBM once.
        out_specs=pl.BlockSpec((B, T, D), lambda l, b, lens_ref: (0, 0, 0)),
        scratch_shapes=[pltpu.VMEM((B, T, D), jnp.float32)],   # carried activation
    )

    # TODO(synk): on v5e only, if the per-layer weight DMA is still exposed,
    #             bump w1/w2 to pipeline_mode=pl.Buffered(3).
    out = pl.pallas_call(
        functools.partial(encoder_layers_kernel, num_heads=H),
        out_shape=jax.ShapeDtypeStruct((B, T, D), jnp.bfloat16),
        grid_spec=grid_spec,
        compiler_params=pltpu.CompilerParams(
            # Both axes carry state through the shared scratch / resident output,
            # so keep them "arbitrary" (megacore split would race on them).
            dimension_semantics=("arbitrary", "arbitrary"),
            vmem_limit_bytes=vmem_limit),
    )(lens.astype(jnp.int32), x0, wqkv, bqkv, wo, w1s, b1s, w2s, vecs)
    return out


# ----------------------------------------------------------------------------
# Deterministic parameter init (weights stored as (in, out) == PyTorch W.T)
# ----------------------------------------------------------------------------
def init_params(key, seq_len, emb_dim, num_layers, ff_dim):
    D, T, F = emb_dim, seq_len, ff_dim

    def nrm(k, shape, scale=0.02):
        return scale * jax.random.normal(k, shape, jnp.float32)

    keys = jax.random.split(key, 2 + num_layers)
    params = {
        "w_in": nrm(keys[0], (D, D)), "b_in": jnp.zeros((1, D), jnp.float32),
        "g_in": jnp.ones((1, D), jnp.float32), "be_in": jnp.zeros((1, D), jnp.float32),
        "pe": nrm(keys[1], (T, D)),
        "layers": [],
    }
    for i in range(num_layers):
        lk = jax.random.split(keys[2 + i], 6)
        params["layers"].append({
            "wq": nrm(lk[0], (D, D)), "bq": jnp.zeros((1, D), jnp.float32),
            "wk": nrm(lk[1], (D, D)), "bk": jnp.zeros((1, D), jnp.float32),
            "wv": nrm(lk[2], (D, D)), "bv": jnp.zeros((1, D), jnp.float32),
            "wo": nrm(lk[3], (D, D)), "bo": jnp.zeros((1, D), jnp.float32),
            "g1": jnp.ones((1, D), jnp.float32), "be1": jnp.zeros((1, D), jnp.float32),
            "w1": nrm(lk[4], (D, F)), "b1": jnp.zeros((1, F), jnp.float32),
            "w2": nrm(lk[5], (F, D)), "b2": jnp.zeros((1, D), jnp.float32),
            "g2": jnp.ones((1, D), jnp.float32), "be2": jnp.zeros((1, D), jnp.float32),
        })
    return params


if __name__ == "__main__":
    # Small shapes consistent with the module:
    #   Encoder(seq_len=8, emb_dim=32, num_layers=2, num_heads=4, ff_dim=64)
    #   input x: (B=2, C1=4, C2=8, T=8) with C1*C2 == emb_dim
    B, C1, C2, T = 2, 4, 8, 8
    emb_dim, num_layers, num_heads, ff_dim = C1 * C2, 2, 4, 64

    key = jax.random.PRNGKey(0)
    kx, kp = jax.random.split(key)
    x4d = jax.random.normal(kx, (B, C1, C2, T), jnp.float32)
    lens = jnp.array([8, 5], jnp.int32)

    params = init_params(kp, T, emb_dim, num_layers, ff_dim)

    out = encoder_forward(x4d, lens, params, num_heads=num_heads)
    out = jax.block_until_ready(out)
    assert out.shape == (B, T, emb_dim), out.shape
    assert bool(jnp.all(jnp.isfinite(out.astype(jnp.float32))))
    print("KERNEL_OK")
</pallas_src>

<mosaic_0001>
module attributes {stable_mosaic.version = 11 : i64} {
  func.func @encoder_prelude_kernel(%arg0: i32, %arg1: memref<1x8x32xbf16, #tpu.memory_space<vmem>>, %arg2: memref<32x32xbf16, #tpu.memory_space<vmem>>, %arg3: memref<3x32xf32, #tpu.memory_space<vmem>>, %arg4: memref<8x32xbf16, #tpu.memory_space<vmem>>, %arg5: memref<1x8x32xf32, #tpu.memory_space<vmem>>) attributes {dimension_semantics = [#tpu.dimension_semantics<parallel>], iteration_bounds = array<i64: 2>, scalar_prefetch = 0 : i64, scratch_operands = 0 : i64, tpu.core_type = #tpu.core_type<tc>, window_params = [{transform_indices = @transform_0, window_bounds = array<i64: 1, 8, 32>}, {pipeline_mode = #tpu.pipeline_mode<synchronous>, transform_indices = @transform_1, window_bounds = array<i64: 32, 32>}, {pipeline_mode = #tpu.pipeline_mode<synchronous>, transform_indices = @transform_2, window_bounds = array<i64: 3, 32>}, {pipeline_mode = #tpu.pipeline_mode<synchronous>, transform_indices = @transform_3, window_bounds = array<i64: 8, 32>}, {transform_indices = @transform_4, window_bounds = array<i64: 1, 8, 32>}]} {
    %c0 = arith.constant 0 : index
    %c0_0 = arith.constant 0 : index
    %0 = vector.load %arg3[%c0, %c0_0] : memref<3x32xf32, #tpu.memory_space<vmem>>, vector<3x32xf32>
    %c0_1 = arith.constant 0 : index
    %c0_2 = arith.constant 0 : index
    %c0_3 = arith.constant 0 : index
    %1 = vector.load %arg1[%c0_1, %c0_2, %c0_3] : memref<1x8x32xbf16, #tpu.memory_space<vmem>>, vector<1x8x32xbf16>
    %2 = vector.shape_cast %1 : vector<1x8x32xbf16> to vector<8x32xbf16>
    %c0_4 = arith.constant 0 : index
    %c0_5 = arith.constant 0 : index
    %3 = vector.load %arg2[%c0_4, %c0_5] : memref<32x32xbf16, #tpu.memory_space<vmem>>, vector<32x32xbf16>
    %cst = arith.constant dense<0.000000e+00> : vector<8x32xf32>
    %4 = tpu.matmul %2, %3, %cst {dimension_numbers = #tpu.dot_dimension_numbers<[1], [0], [0], [1], [0, 0, 1, 1], [], []>} : vector<8x32xbf16>, vector<32x32xbf16>, vector<8x32xf32> -> vector<8x32xf32>
    %5 = vector.extract_strided_slice %0 {offsets = [0, 0], sizes = [1, 32], strides = [1, 1]} : vector<3x32xf32> to vector<1x32xf32>
    %6 = vector.broadcast %5 : vector<1x32xf32> to vector<8x32xf32>
    %7 = arith.addf %4, %6 : vector<8x32xf32>
    %8 = vector.extract_strided_slice %0 {offsets = [1, 0], sizes = [1, 32], strides = [1, 1]} : vector<3x32xf32> to vector<1x32xf32>
    %9 = vector.extract_strided_slice %0 {offsets = [2, 0], sizes = [1, 32], strides = [1, 1]} : vector<3x32xf32> to vector<1x32xf32>
    %cst_6 = arith.constant dense<0.000000e+00> : vector<8xf32>
    %10 = vector.multi_reduction <add>, %7, %cst_6 [1] : vector<8x32xf32> to vector<8xf32>
    %11 = vector.shape_cast %10 : vector<8xf32> to vector<8x1xf32>
    %cst_7 = arith.constant 3.200000e+01 : f32
    %12 = vector.broadcast %cst_7 : f32 to vector<8x1xf32>
    %13 = arith.divf %11, %12 : vector<8x1xf32>
    %14 = vector.broadcast %13 : vector<8x1xf32> to vector<8x32xf32>
    %15 = arith.subf %7, %14 : vector<8x32xf32>
    %16 = arith.mulf %15, %15 : vector<8x32xf32>
    %cst_8 = arith.constant dense<0.000000e+00> : vector<8xf32>
    %17 = vector.multi_reduction <add>, %16, %cst_8 [1] : vector<8x32xf32> to vector<8xf32>
    %18 = vector.shape_cast %17 : vector<8xf32> to vector<8x1xf32>
    %cst_9 = arith.constant 3.200000e+01 : f32
    %19 = vector.broadcast %cst_9 : f32 to vector<8x1xf32>
    %20 = arith.divf %18, %19 : vector<8x1xf32>
    %21 = vector.broadcast %13 : vector<8x1xf32> to vector<8x32xf32>
    %22 = arith.subf %7, %21 : vector<8x32xf32>
    %cst_10 = arith.constant 9.99999974E-6 : f32
    %23 = vector.broadcast %cst_10 : f32 to vector<8x1xf32>
    %24 = arith.addf %20, %23 : vector<8x1xf32>
    %25 = math.rsqrt %24 : vector<8x1xf32>
    %26 = vector.broadcast %25 : vector<8x1xf32> to vector<8x32xf32>
    %27 = arith.mulf %22, %26 : vector<8x32xf32>
    %28 = vector.broadcast %8 : vector<1x32xf32> to vector<8x32xf32>
    %29 = arith.mulf %27, %28 : vector<8x32xf32>
    %30 = vector.broadcast %9 : vector<1x32xf32> to vector<8x32xf32>
    %31 = arith.addf %29, %30 : vector<8x32xf32>
    %c0_11 = arith.constant 0 : index
    %c0_12 = arith.constant 0 : index
    %32 = vector.load %arg4[%c0_11, %c0_12] : memref<8x32xbf16, #tpu.memory_space<vmem>>, vector<8x32xbf16>
    %33 = arith.extf %32 : vector<8x32xbf16> to vector<8x32xf32>
    %34 = arith.addf %31, %33 : vector<8x32xf32>
    %c0_13 = arith.constant 0 : index
    %c0_14 = arith.constant 0 : index
    %c0_15 = arith.constant 0 : index
    %35 = vector.load %arg5[%c0_13, %c0_14, %c0_15] : memref<1x8x32xf32, #tpu.memory_space<vmem>>, vector<1x8x32xf32>
    %36 = vector.shape_cast %35 : vector<1x8x32xf32> to vector<8x32xf32>
    %37 = vector.shape_cast %34 : vector<8x32xf32> to vector<1x8x32xf32>
    tpu.vector_store %arg5[%c0_13, %c0_14, %c0_15], %37 {strides = array<i32>} : memref<1x8x32xf32, #tpu.memory_space<vmem>>, vector<1x8x32xf32>,
    return
  }
  func.func @transform_0(%arg0: i32) -> (i32, i32, i32) {
    %c0_i32 = arith.constant 0 : i32
    %c0_i32_0 = arith.constant 0 : i32
    %c0_i32_1 = arith.constant 0 : i32
    return %arg0, %c0_i32, %c0_i32_0 : i32, i32, i32
  }
  func.func @transform_1(%arg0: i32) -> (i32, i32) {
    %c0_i32 = arith.constant 0 : i32
    %c0_i32_0 = arith.constant 0 : i32
    %c0_i32_1 = arith.constant 0 : i32
    return %c0_i32, %c0_i32_0 : i32, i32
  }
  func.func @transform_2(%arg0: i32) -> (i32, i32) {
    %c0_i32 = arith.constant 0 : i32
    %c0_i32_0 = arith.constant 0 : i32
    %c0_i32_1 = arith.constant 0 : i32
    return %c0_i32, %c0_i32_0 : i32, i32
  }
  func.func @transform_3(%arg0: i32) -> (i32, i32) {
    %c0_i32 = arith.constant 0 : i32
    %c0_i32_0 = arith.constant 0 : i32
    %c0_i32_1 = arith.constant 0 : i32
    return %c0_i32, %c0_i32_0 : i32, i32
  }
  func.func @transform_4(%arg0: i32) -> (i32, i32, i32) {
    %c0_i32 = arith.constant 0 : i32
    %c0_i32_0 = arith.constant 0 : i32
    %c0_i32_1 = arith.constant 0 : i32
    return %arg0, %c0_i32, %c0_i32_0 : i32, i32, i32
  }
}

</mosaic_0001>

<llo_original>
// kernel: tpu_custom_call.1
$region0: #{tpu_custom_call.1}
  #allocation0 [shape = 'u32[]', space=smem, size = 0x4, offset = 0x4, fixed_abs, tag = 'smem constant byte address 0x4 - core index']
  #allocation1 [shape = 'u32[144,128]{1,0:T(1,128)}', space=vmem, size = 0x12000, scoped, tag = 'internal scratch']
  %s0 = inlined_call_operand.hbm [shape: bf16[2,8,32], index: 0, kind: input, shape index: {}]
  %s1 = inlined_call_operand.hbm [shape: bf16[32,32], index: 1, kind: input, shape index: {}]
  %s2 = inlined_call_operand.hbm [shape: f32[3,32], index: 2, kind: input, shape index: {}]
  %s3 = inlined_call_operand.hbm [shape: bf16[8,32], index: 3, kind: input, shape index: {}]
  %s4 = inlined_call_operand.hbm [shape: f32[2,8,32], index: 4, kind: output, shape index: {}]
  %s5 = sld [smem:[#allocation0]]
  $region65: #{tpu_custom_call.1} parent=0
    _
  %s7 = ssub.s32 1, %s5
  %s8 = scalar_select 0, %s7, %s5
  $region1: #{tpu_custom_call.1} parent=0
    #allocation2 [shape = 'u8[4096]{0}', space=vmem, size = 0x1000, scoped, tag = 'input window, operand 0']
    #allocation3 [shape = 's32[2]{0}', space=sflag, size = 0x8, scoped, tag = 'scoped memory for tpu_custom_call.1']
    #allocation4 [shape = 's32[2]{0}', space=sflag, size = 0x8, scoped, tag = 'scoped memory for tpu_custom_call.1']
    #allocation5 [shape = 'u8[8192]{0}', space=vmem, size = 0x2000, scoped, tag = 'input window, operand 1, single buffered']
    #allocation6 [shape = 's32[1]{0}', space=sflag, size = 0x4, scoped, tag = 'scoped memory for tpu_custom_call.1']
    #allocation7 [shape = 'u8[2048]{0}', space=vmem, size = 0x800, scoped, tag = 'input window, operand 2, single buffered']
    #allocation8 [shape = 'u8[2048]{0}', space=vmem, size = 0x800, scoped, tag = 'input window, operand 3, single buffered']
    #allocation9 [shape = 's32[1]{0}', space=sflag, size = 0x4, scoped, tag = 'scoped memory for tpu_custom_call.1']
    #allocation10 [shape = 'u8[8192]{0}', space=vmem, size = 0x2000, scoped, tag = 'output window, operand 0']
    %9 = vsyncpa [#allocation3], 0
    %s10 = scalar_lea.sflag [#allocation3], 1
    %11 = vsyncpa %s10, 0
    %12 = vsyncpa [#allocation6], 0
    %13 = vsyncpa [#allocation9], 0
    %14 = vsyncpa [#allocation4], 0
    %s15 = scalar_lea.sflag [#allocation4], 1
    %16 = vsyncpa %s15, 0
    loop: start=0, step=1, limit=4
    $region2: #{tpu_custom_call.1} parent=1 // loop_pre_header
      _
    $region3: #{tpu_custom_call.1} parent=1 // loop_header
      %s18 = sphi 0, %s22
      %p19 = scmp.ge.s32.totalorder %s18, 4
      %s28 = sphi 0, %s30
      %s31 = sphi 0, %s28
      %s32 = sphi 0, %s31
      %s48 = sphi 0, %s32
      %s52 = sphi 0, %s52
      %s54 = sphi 0, %s52
      %s55 = sphi 0, %s54
      %s69 = sphi 0, %s55
      %s73 = sphi 0, %s73
      %s75 = sphi 0, %s73
      %s76 = sphi 0, %s75
      %s90 = sphi 0, %s76
      %s94 = sphi 0, %s94
      %s96 = sphi 0, %s94
      %s97 = sphi 0, %s96
      %s111 = sphi 0, %s97
      %s117 = sphi 0, %s119
      %s120 = sphi 0, %s117
      %s121 = sphi 0, %s120
      %s137 = sphi 0, %s121
    $region4: #{tpu_custom_call.1} parent=1 // loop_header_branch
      %21 = sbr.rel (%p19) target = $region8
    $region5: #{tpu_custom_call.1} parent=1 // loop_body
      %s23 = ssub.s32 %s18, 1
      %s24 = ssub.s32 %s18, 2
      %s25 = sadd.s32 %s18, 1
      %s26 = ssub.s32 %s18, %s25
      %p27 = scmp.eq.s32.totalorder %s26, 0
      %s29 = sadd.s32 %s28, 1
      %s30 = scalar_select %p27, %s28, %s29
      %p33 = pneg %p27
      %p34 = scmp.eq.s32.totalorder %s18, 1
      %p35 = por %p33, %p34
      %p36 = scmp.ne.s32.totalorder %s28, %s31
      %p37 = scmp.eq.s32.totalorder %s18, 0
      %p38 = por %p36, %p37
      %p39 = scmp.ne.s32.totalorder %s28, %s31
      %p40 = scmp.eq.s32.totalorder %s23, 1
      %p41 = por %p39, %p40
      %p42 = scmp.ne.s32.totalorder %s31, %s32
      %p43 = scmp.eq.s32.totalorder %s23, 0
      %p44 = por %p42, %p43
      %p45 = scmp.ne.s32.totalorder %s31, %s32
      %p46 = scmp.eq.s32.totalorder %s24, 1
      %p47 = por %p45, %p46
      %p49 = scmp.ne.s32.totalorder %s32, %s48
      %p50 = scmp.eq.s32.totalorder %s24, 0
      %p51 = por %p49, %p50
      %s53 = sadd.s32 %s52, 1
      %p56 = scmp.eq.s32.totalorder %s18, 1
      %p57 = scmp.ne.s32.totalorder %s52, %s54
      %p58 = scmp.eq.s32.totalorder %s18, 0
      %p59 = por %p57, %p58
      %p60 = scmp.ne.s32.totalorder %s52, %s54
      %p61 = scmp.eq.s32.totalorder %s23, 1
      %p62 = por %p60, %p61
      %p63 = scmp.ne.s32.totalorder %s54, %s55
      %p64 = scmp.eq.s32.totalorder %s23, 0
      %p65 = por %p63, %p64
      %p66 = scmp.ne.s32.totalorder %s54, %s55
      %p67 = scmp.eq.s32.totalorder %s24, 1
      %p68 = por %p66, %p67
      %p70 = scmp.ne.s32.totalorder %s55, %s69
      %p71 = scmp.eq.s32.totalorder %s24, 0
      %p72 = por %p70, %p71
      %s74 = sadd.s32 %s73, 1
      %p77 = scmp.eq.s32.totalorder %s18, 1
      %p78 = scmp.ne.s32.totalorder %s73, %s75
      %p79 = scmp.eq.s32.totalorder %s18, 0
      %p80 = por %p78, %p79
      %p81 = scmp.ne.s32.totalorder %s73, %s75
      %p82 = scmp.eq.s32.totalorder %s23, 1
      %p83 = por %p81, %p82
      %p84 = scmp.ne.s32.totalorder %s75, %s76
      %p85 = scmp.eq.s32.totalorder %s23, 0
      %p86 = por %p84, %p85
      %p87 = scmp.ne.s32.totalorder %s75, %s76
      %p88 = scmp.eq.s32.totalorder %s24, 1
      %p89 = por %p87, %p88
      %p91 = scmp.ne.s32.totalorder %s76, %s90
      %p92 = scmp.eq.s32.totalorder %s24, 0
      %p93 = por %p91, %p92
      %s95 = sadd.s32 %s94, 1
      %p98 = scmp.eq.s32.totalorder %s18, 1
      %p99 = scmp.ne.s32.totalorder %s94, %s96
      %p100 = scmp.eq.s32.totalorder %s18, 0
      %p101 = por %p99, %p100
      %p102 = scmp.ne.s32.totalorder %s94, %s96
      %p103 = scmp.eq.s32.totalorder %s23, 1
      %p104 = por %p102, %p103
      %p105 = scmp.ne.s32.totalorder %s96, %s97
      %p106 = scmp.eq.s32.totalorder %s23, 0
      %p107 = por %p105, %p106
      %p108 = scmp.ne.s32.totalorder %s96, %s97
      %p109 = scmp.eq.s32.totalorder %s24, 1
      %p110 = por %p108, %p109
      %p112 = scmp.ne.s32.totalorder %s97, %s111
      %p113 = scmp.eq.s32.totalorder %s24, 0
      %p114 = por %p112, %p113
      %s115 = ssub.s32 %s18, %s25
      %p116 = scmp.eq.s32.totalorder %s115, 0
      %s118 = sadd.s32 %s117, 1
      %s119 = scalar_select %p116, %s117, %s118
      %p122 = pneg %p116
      %p123 = scmp.eq.s32.totalorder %s18, 1
      %p124 = por %p122, %p123
      %p125 = scmp.ne.s32.totalorder %s117, %s120
      %p126 = scmp.eq.s32.totalorder %s18, 0
      %p127 = por %p125, %p126
      %p128 = scmp.ne.s32.totalorder %s117, %s120
      %p129 = scmp.eq.s32.totalorder %s23, 1
      %p130 = por %p128, %p129
      %p131 = scmp.ne.s32.totalorder %s120, %s121
      %p132 = scmp.eq.s32.totalorder %s23, 0
      %p133 = por %p131, %p132
      %p134 = scmp.ne.s32.totalorder %s120, %s121
      %p135 = scmp.eq.s32.totalorder %s24, 1
      %p136 = por %p134, %p135
      %p138 = scmp.ne.s32.totalorder %s121, %s137
      %p139 = scmp.eq.s32.totalorder %s24, 0
      %p140 = por %p138, %p139
      %p141 = scmp.le.s32.totalorder 1, %s18
      %p142 = scmp.lt.s32.totalorder %s18, 3
      %p143 = pnand %p141, %p142
      %p144 = pneg %p143
      // Predicated region
      $region9: #{tpu_custom_call.1} parent=5 // pred_check
        _
      $region10: #{tpu_custom_call.1} parent=5 // pred_check_branch
        %146 = sbr.rel (%p143) target = $region12
      $region11: #{tpu_custom_call.1} parent=5 // pred_region
        %s147 = ssub.s32 %s18, 1
        // Predicated region
        $region13: #{tpu_custom_call.1} parent=11 // pred_check
          %p148 = pneg %p65
        $region14: #{tpu_custom_call.1} parent=11 // pred_check_branch
          %150 = sbr.rel (%p148) target = $region16
        $region15: #{tpu_custom_call.1} parent=11 // pred_region
          %s152 = ssub.s32 256, 256
          %153 = vsyncadd [#allocation6], %s152
          %s154 = sshll.u32 [#allocation5], 4
          %s155 = int_to_ptr.vmem [resolvable:$true] %s154
          %160 = dma.hbm_to_vmem [thread:$0]  %s1, 256, %s155, [#allocation6], 64, 64, 4
        $region16: #{tpu_custom_call.1} parent=11 // pred_fallthru
          _
        // Predicated region
        $region17: #{tpu_custom_call.1} parent=11 // pred_check
          %p161 = pneg %p86
        $region18: #{tpu_custom_call.1} parent=11 // pred_check_branch
          %163 = sbr.rel (%p161) target = $region20
        $region19: #{tpu_custom_call.1} parent=11 // pred_region
          %s165 = ssub.s32 64, 64
          %166 = vsyncadd [#allocation6], %s165
          %s168 = sshll.u32 [#allocation7], 4
          %s169 = int_to_ptr.vmem [resolvable:$true] %s168
          %171 = dma.hbm_to_vmem [thread:$0]  %s2, 64, %s169, [#allocation6]
        $region20: #{tpu_custom_call.1} parent=11 // pred_fallthru
          _
        // Predicated region
        $region21: #{tpu_custom_call.1} parent=11 // pred_check
          %p172 = pneg %p107
        $region22: #{tpu_custom_call.1} parent=11 // pred_check_branch
          %174 = sbr.rel (%p172) target = $region24
        $region23: #{tpu_custom_call.1} parent=11 // pred_region
          %s176 = ssub.s32 64, 64
          %177 = vsyncadd [#allocation9], %s176
          %s179 = sshll.u32 [#allocation8], 4
          %s180 = int_to_ptr.vmem [resolvable:$true] %s179
          %182 = dma.hbm_to_vmem [thread:$0]  %s3, 64, %s180, [#allocation9]
        $region24: #{tpu_custom_call.1} parent=11 // pred_fallthru
          _
      $region12: #{tpu_custom_call.1} parent=5 // pred_fallthru
        _
      %p183 = scmp.lt.s32.totalorder %s18, 2
      // Predicated region
      $region25: #{tpu_custom_call.1} parent=5 // pred_check
        %p184 = pneg %p183
      $region26: #{tpu_custom_call.1} parent=5 // pred_check_branch
        %186 = sbr.rel (%p184) target = $region28
      $region27: #{tpu_custom_call.1} parent=5 // pred_region
        // Predicated region
        $region29: #{tpu_custom_call.1} parent=27 // pred_check
          %p187 = pneg %p38
        $region30: #{tpu_custom_call.1} parent=27 // pred_check_branch
          %189 = sbr.rel (%p187) target = $region32
        $region31: #{tpu_custom_call.1} parent=27 // pred_region
          %s190 = sand.u32 %s28, 1
          %s191 = scalar_lea.sflag [#allocation3], %s190
          %s192 = sand.u32 %s28, 1
          %s193 = smul.addr %s192, 4
          %s194 = scalar_lea.vmem [#allocation2], %s193
          %s196 = ssub.s32 64, 64
          %197 = vsyncadd %s191, %s196
          %s198 = smul.addr %s18, 64
          %s199 = scalar_lea.hbm %s0, %s198
          %s201 = sshll.u32 %s194, 4
          %s202 = int_to_ptr.vmem [resolvable:$true] %s201
          %204 = dma.hbm_to_vmem [thread:$0]  %s199, 64, %s202, %s191
        $region32: #{tpu_custom_call.1} parent=27 // pred_fallthru
          _
      $region28: #{tpu_custom_call.1} parent=5 // pred_fallthru
        _
      %p205 = scmp.le.s32.totalorder 1, %s18
      %p206 = scmp.lt.s32.totalorder %s18, 3
      %p207 = pnand %p205, %p206
      %p208 = pneg %p207
      // Predicated region
      $region33: #{tpu_custom_call.1} parent=5 // pred_check
        _
      $region34: #{tpu_custom_call.1} parent=5 // pred_check_branch
        %210 = sbr.rel (%p207) target = $region36
      $region35: #{tpu_custom_call.1} parent=5 // pred_region
        %s211 = ssub.s32 %s18, 1
        %s212 = sand.u32 %s31, 1
        %s213 = scalar_lea.sflag [#allocation3], %s212
        %s214 = sand.u32 %s31, 1
        %s215 = smul.addr %s214, 4
        %s216 = scalar_lea.vmem [#allocation2], %s215
        // Predicated region
        $region37: #{tpu_custom_call.1} parent=35 // pred_check
          %p217 = pneg %p44
        $region38: #{tpu_custom_call.1} parent=35 // pred_check_branch
          %219 = sbr.rel (%p217) target = $region40
        $region39: #{tpu_custom_call.1} parent=35 // pred_region
          %220 = dma.done %s213, 64
        $region40: #{tpu_custom_call.1} parent=35 // pred_fallthru
          _
        // Predicated region
        $region41: #{tpu_custom_call.1} parent=35 // pred_check
          %p221 = pneg %p65
        $region42: #{tpu_custom_call.1} parent=35 // pred_check_branch
          %223 = sbr.rel (%p221) target = $region44
        $region43: #{tpu_custom_call.1} parent=35 // pred_region
          %224 = dma.done [#allocation6], 256
        $region44: #{tpu_custom_call.1} parent=35 // pred_fallthru
          _
        // Predicated region
        $region45: #{tpu_custom_call.1} parent=35 // pred_check
          %p225 = pneg %p86
        $region46: #{tpu_custom_call.1} parent=35 // pred_check_branch
          %227 = sbr.rel (%p225) target = $region48
        $region47: #{tpu_custom_call.1} parent=35 // pred_region
          %228 = dma.done [#allocation6], 64
        $region48: #{tpu_custom_call.1} parent=35 // pred_fallthru
          _
        // Predicated region
        $region49: #{tpu_custom_call.1} parent=35 // pred_check
          %p229 = pneg %p107
        $region50: #{tpu_custom_call.1} parent=35 // pred_check_branch
          %231 = sbr.rel (%p229) target = $region52
        $region51: #{tpu_custom_call.1} parent=35 // pred_region
          %232 = dma.done [#allocation9], 64
        $region52: #{tpu_custom_call.1} parent=35 // pred_fallthru
          _
        %s233 = sand.u32 %s31, 1
        %s234 = scalar_lea.sflag [#allocation3], %s233
        %s235 = sand.u32 %s31, 1
        %s236 = smul.addr %s235, 4
        %s237 = scalar_lea.vmem [#allocation2], %s236
        %p238 = pneg %p44
        %p239 = pneg %p41
        %p240 = pneg %p65
        %p241 = pneg %p62
        %p242 = pneg %p86
        %p243 = pneg %p83
        %p244 = pneg %p107
        %p245 = pneg %p104
        %p246 = pneg %p133
        %p247 = pneg %p130
        %s248 = sand.u32 %s120, 1
        %s249 = scalar_lea.sflag [#allocation4], %s248
        %s250 = sand.u32 %s120, 1
        %s251 = smul.addr %s250, 8
        %s252 = scalar_lea.vmem [#allocation10], %s251
        %v254 = vld [vmem:[#allocation7] sm:$0x7]
        %v255 = vld [vmem:[%s216] sm:$0xf]
        %v256 = vld [vmem:[#allocation5] sm:$0xf]
        %v257 = vld [vmem:[#allocation5 + $0x4] sm:$0xf]
        %v258 = vld [vmem:[#allocation5 + $0x8] sm:$0xf]
        %v259 = vld [vmem:[#allocation5 + $0xc] sm:$0xf]
        %v260 = vlaneseq
        %v261 = vshrl.u32 %v260, 7
        %v262 = vsub.s32 0, %v261
        %v263 = vrot.slane %v254, %v262
        %v268 = vunpack.c.l.b16 %v256
        %v269 = vunpack.c.l.b16 %v257
        %v270 = vunpack.c.l.b16 %v258
        %v271 = vunpack.c.l.b16 %v259
        %v272 = vpack.c.b16 %v269, %v268
        %v273 = vpack.c.b16 %v271, %v270
        %vm276 = vcmask 261120
        %v278 = vsel %vm276, %v255, 0
        %280 = vmatprep.subr.bf16.mxu0 0
        %281 = vmatpush1.bf16.msra.mxu0 %v272
        %282 = vmatprep.subr.bf16.mxu0 0
        %283 = vmatpush1.bf16.msra.mxu0 %v273
        %284 = vmatprep.subr.bf16.mxu0 0
        %285 = vmatpush1.bf16.msra.mxu0 0
        %286 = vmatprep.subr.bf16.mxu0 0
        %287 = vmatpush1.bf16.msra.mxu0 0
        %288 = vmatprep.subr.bf16.mxu0 0
        %289 = vmatpush1.bf16.msra.mxu0 0
        %290 = vmatprep.subr.bf16.mxu0 0
        %291 = vmatpush1.bf16.msra.mxu0 0
        %292 = vmatprep.subr.bf16.mxu0 0
        %293 = vmatpush1.bf16.msra.mxu0 0
        %294 = vmatprep.subr.bf16.mxu0 0
        %295 = vmatpush1.bf16.msra.mxu0 0
        %296 = vmatprep.subr.bf16.mxu0 0
        %297 = vmatpush1.bf16.msra.mxu0 0
        %298 = vmatprep.subr.bf16.mxu0 0
        %299 = vmatpush1.bf16.msra.mxu0 0
        %300 = vmatprep.subr.bf16.mxu0 0
        %301 = vmatpush1.bf16.msra.mxu0 0
        %302 = vmatprep.subr.bf16.mxu0 0
        %303 = vmatpush1.bf16.msra.mxu0 0
        %304 = vmatprep.subr.bf16.mxu0 0
        %305 = vmatpush1.bf16.msra.mxu0 0
        %306 = vmatprep.subr.bf16.mxu0 0
        %307 = vmatpush1.bf16.msra.mxu0 0
        %308 = vmatprep.subr.bf16.mxu0 0
        %309 = vmatpush1.bf16.msra.mxu0 0
        %310 = vmatprep.subr.bf16.mxu0 0
        %311 = vmatpush1.bf16.msra.mxu0 0
        %312 = vmatprep.mubr.bf16.mxu0 0
        %313 = vmatmul.mubr.bf16.gmra.mrb[0].mxu0 %v278
        %v314 = vpop.f32.mrb[0].mxu0
        %v315 = vadd.f32 %v263, %v314
        %v316 = vpop.f32.mrb[0].mxu0
        %v317 = vpop.f32.mrb[0].mxu0
        %v318 = vpop.f32.mrb[0].mxu0
        %319 = vdwg.mxu0
        %v320 = vsel %vm276, %v315, 0.0
        %321 = vadd.xlane.f32.xlu0 %v320
        %v322 = vpop.xlane.xlu0 %321
        %v323 = vrcp.pop 32.0
        %v324 = vmul.f32 %v322, %v323
        %v325 = vsub.f32 %v315, %v324
        %v326 = vmul.f32 %v325, %v325
        %v327 = vsel %vm276, %v326, 0.0
        %328 = vadd.xlane.f32.xlu0 %v327
        %v329 = vpop.xlane.xlu0 %328
        %v330 = vmul.f32 %v329, %v323
        %v331 = vadd.f32 %v330, 1e-05
        %v332 = vrsqrt.pop %v331
        %v333 = vmul.f32 %v325, %v332
        %v334 = vlaneseq
        %v335 = vshrl.u32 %v334, 7
        %v336 = vsub.s32 1, %v335
        %v337 = vrot.slane %v254, %v336
        %v338 = vmul.f32 %v333, %v337
        %v339 = vlaneseq
        %v340 = vshrl.u32 %v339, 7
        %v341 = vsub.s32 2, %v340
        %v342 = vrot.slane %v254, %v341
        %v343 = vadd.f32 %v338, %v342
        %v344 = vld [vmem:[#allocation8] sm:$0xf]
        %v345 = vunpack.c.l.bf16 %v344
        %v346 = vadd.f32 %v343, %v345
        %347 = vst.msk [vmem:[%s252] sm:$0xff] %vm276, %v346
        %s348 = sand.u32 %s120, 1
        %s349 = scalar_lea.sflag [#allocation4], %s348
        %s350 = sand.u32 %s120, 1
        %s351 = smul.addr %s350, 8
        %s352 = scalar_lea.vmem [#allocation10], %s351
        // Predicated region
        $region53: #{tpu_custom_call.1} parent=35 // pred_check
          %p353 = pneg %p130
        $region54: #{tpu_custom_call.1} parent=35 // pred_check_branch
          %355 = sbr.rel (%p353) target = $region56
        $region55: #{tpu_custom_call.1} parent=35 // pred_region
          %s357 = ssub.s32 128, 128
          %358 = vsyncadd %s349, %s357
          %s359 = smul.addr %s23, 128
          %s360 = scalar_lea.hbm %s4, %s359
          %s362 = sshll.u32 %s352, 4
          %s363 = int_to_ptr.vmem [resolvable:$true] %s362
          %365 = dma.vmem_to_hbm [thread:$0]  %s363, 128, %s360, %s349
        $region56: #{tpu_custom_call.1} parent=35 // pred_fallthru
          _
      $region36: #{tpu_custom_call.1} parent=5 // pred_fallthru
        _
      %p366 = scmp.le.s32.totalorder 2, %s18
      // Predicated region
      $region57: #{tpu_custom_call.1} parent=5 // pred_check
        %p367 = pneg %p366
      $region58: #{tpu_custom_call.1} parent=5 // pred_check_branch
        %369 = sbr.rel (%p367) target = $region60
      $region59: #{tpu_custom_call.1} parent=5 // pred_region
        %s370 = ssub.s32 %s18, 2
        // Predicated region
        $region61: #{tpu_custom_call.1} parent=59 // pred_check
          %p371 = pneg %p136
        $region62: #{tpu_custom_call.1} parent=59 // pred_check_branch
          %373 = sbr.rel (%p371) target = $region64
        $region63: #{tpu_custom_call.1} parent=59 // pred_region
          %s374 = sand.u32 %s121, 1
          %s375 = scalar_lea.sflag [#allocation4], %s374
          %s376 = sand.u32 %s121, 1
          %s377 = smul.addr %s376, 8
          %s378 = scalar_lea.vmem [#allocation10], %s377
          %379 = dma.done %s375, 128
        $region64: #{tpu_custom_call.1} parent=59 // pred_fallthru
          _
      $region60: #{tpu_custom_call.1} parent=5 // pred_fallthru
        _
    $region6: #{tpu_custom_call.1} parent=1 // loop_footer
      %s22 = sadd.s32 1, %s18
    $region7: #{tpu_custom_call.1} parent=1 // loop_footer_branch
      %17 = sbr.rel target = $region3
    $region8: #{tpu_custom_call.1} parent=1 // loop_exit
      _
    %380 = vsyncpa [#allocation3], 1
    %s381 = scalar_lea.sflag [#allocation3], 1
    %382 = vsyncpa %s381, 1
    %383 = vsyncpa [#allocation6], 1
    %384 = vsyncpa [#allocation9], 1
    %385 = vsyncpa [#allocation4], 1
    %s386 = scalar_lea.sflag [#allocation4], 1
    %387 = vsyncpa %s386, 1

</llo_original>
